<compile_context>
chip_gen: v7x
topology: tpu7x:2x2x1
jax: 0.10.0
libtpu: 0.0.40
codegen_flags: <defaults>
</compile_context>

<pallas_src>
import math

import jax
import jax.numpy as jnp
from jax.experimental import pallas as pl
from jax.experimental.pallas import tpu as pltpu


def _conv1x1_silu_kernel(x_ref, w_ref, b_ref, o_ref):
    # x_ref: (1, Cin, tn) compute dtype (bf16)
    # w_ref: (Cout, Cin)  compute dtype (bf16), resident across the grid
    # b_ref: (Cout, 1)    f32, resident across the grid
    # o_ref: (1, Cout, tn) output dtype
    y = jnp.dot(w_ref[...], x_ref[0], preferred_element_type=jnp.float32)
    y = y + b_ref[...]                       # broadcast over lanes (f32)
    o_ref[0] = (y * jax.nn.sigmoid(y)).astype(o_ref.dtype)   # SiLU in f32


def _choose_spatial_tile(l_pad, cin, cout, in_bytes, out_bytes,
                         max_tile=1024, vmem_budget=20 * 2**20):
    """Largest multiple-of-128 lane tile that divides l_pad, is <= max_tile and
    whose double-buffered in/out blocks plus the resident weight fit VMEM."""
    resident = cout * cin * in_bytes + cout * 4
    per_lane = 2 * (cin * in_bytes + cout * out_bytes)   # double-buffered in+out
    cap = max(128, ((vmem_budget - resident) // per_lane // 128) * 128)
    max_tile = min(max_tile, cap)
    best, t = 128, 128
    while t <= min(l_pad, max_tile):
        if l_pad % t == 0:
            best = t
        t += 128
    return best


def conv1x1_silu(x_flat, w, b, *, out_dtype, max_tile=1024):
    """Fused 1x1 conv + bias + SiLU in NCHW layout.

    x_flat: (B, Cin, L)  (L = H*W, spatial in lanes)
    w:      (Cout, Cin)  (native PyTorch conv weight layout)
    b:      (Cout,)
    returns (B, Cout, L) in out_dtype.
    """
    B, Cin, L = x_flat.shape
    Cout = w.shape[0]

    # Pad the spatial axis to a multiple of 128 (no divisibility assert).
    l_pad = ((L + 127) // 128) * 128
    if l_pad != L:
        x_flat = jnp.pad(x_flat, ((0, 0), (0, 0), (0, l_pad - L)))

    in_bytes = x_flat.dtype.itemsize
    out_bytes = jnp.dtype(out_dtype).itemsize
    tn = _choose_spatial_tile(l_pad, Cin, Cout, in_bytes, out_bytes, max_tile)

    b2 = b.astype(jnp.float32).reshape(Cout, 1)

    # Explicit scoped-VMEM budget (v5e default is only 16 MiB; v7x physical 64 MiB).
    needed = (2 * tn * (Cin * in_bytes + Cout * out_bytes)
              + Cout * Cin * in_bytes + Cout * 8)
    vmem_limit = int(min(32 * 2**20, max(4 * needed, 16 * 2**20)))

    cost = pl.CostEstimate(
        flops=2 * B * l_pad * Cin * Cout,
        transcendentals=B * l_pad * Cout,
        bytes_accessed=(B * l_pad * Cin * in_bytes
                        + Cout * Cin * in_bytes
                        + B * l_pad * Cout * out_bytes),
    )

    y = pl.pallas_call(
        _conv1x1_silu_kernel,
        out_shape=jax.ShapeDtypeStruct((B, Cout, l_pad), out_dtype),
        grid_spec=pltpu.PrefetchScalarGridSpec(
            num_scalar_prefetch=0,
            grid=(B, l_pad // tn),
            in_specs=[
                pl.BlockSpec((1, Cin, tn), lambda bi, si: (bi, 0, si)),
                pl.BlockSpec((Cout, Cin), lambda bi, si: (0, 0)),
                pl.BlockSpec((Cout, 1), lambda bi, si: (0, 0)),
            ],
            out_specs=pl.BlockSpec((1, Cout, tn), lambda bi, si: (bi, 0, si)),
        ),
        compiler_params=pltpu.CompilerParams(
            dimension_semantics=("parallel", "parallel"),
            vmem_limit_bytes=vmem_limit,
        ),
        cost_estimate=cost,
    )(x_flat, w, b2)

    if l_pad != L:
        y = y[:, :, :L]
    return y


def init_pixel_shuffle_upsample_params(key, dim, dim_out=None):
    """Mirrors PixelShuffleUpsample.__init__ / init_conv_ deterministically."""
    dim_out = dim if dim_out is None else dim_out
    # kaiming_uniform_ on (dim_out, dim, 1, 1): bound = sqrt(6 / fan_in), fan_in = dim
    bound = math.sqrt(6.0 / dim)
    base = jax.random.uniform(key, (dim_out, dim), jnp.float32,
                              minval=-bound, maxval=bound)
    # repeat 'o ... -> (o 4) ...': each output channel repeated 4x, o-major.
    w = jnp.repeat(base, 4, axis=0)               # (4*dim_out, dim) == (Cout, Cin)
    b = jnp.zeros((4 * dim_out,), jnp.float32)
    return w, b, dim_out


def pixel_shuffle_upsample(x_nchw, w, b, dim_out, *, compute_dtype=jnp.bfloat16):
    """Forward pass. x_nchw: (B, C, H, W) -> (B, dim_out, 2H, 2W)."""
    B, C, H, W = x_nchw.shape
    x_flat = x_nchw.reshape(B, C, H * W)          # pure reshape, no transpose

    # Hot path: 1x1 conv (W @ x) + bias + SiLU, bf16 I/O, f32 accumulation.
    y = conv1x1_silu(x_flat.astype(compute_dtype), w.astype(compute_dtype), b,
                     out_dtype=x_nchw.dtype)      # (B, 4*dim_out, H*W)

    # PixelShuffle(2): out[b, c, 2h+r1, 2w+r2] = y[b, c*4 + r1*2 + r2, h, w]
    # TODO(synk): fuse this lane-interleaving shuffle into the kernel's output
    # BlockSpec to save one HBM pass over the (largest) upsampled tensor.
    y = y.reshape(B, dim_out, 2, 2, H, W)
    y = jnp.transpose(y, (0, 1, 4, 2, 5, 3))
    return y.reshape(B, dim_out, 2 * H, 2 * W)


if __name__ == "__main__":
    key = jax.random.PRNGKey(0)
    k_w, k_x = jax.random.split(key)

    B, dim, H, W = 2, 4, 16, 16
    w, b, dim_out = init_pixel_shuffle_upsample_params(k_w, dim)
    x = jax.random.normal(k_x, (B, dim, H, W), jnp.float32)

    out = pixel_shuffle_upsample(x, w, b, dim_out)
    out = jax.block_until_ready(out)
    assert out.shape == (B, dim_out, 2 * H, 2 * W), out.shape

    # Pure-JAX reference using the same bf16-cast inputs / f32 accumulation.
    xb = x.astype(jnp.bfloat16).astype(jnp.float32)
    wb = w.astype(jnp.bfloat16).astype(jnp.float32)
    y_ref = jnp.einsum("bchw,oc->bohw", xb, wb) + b[None, :, None, None]
    y_ref = y_ref * jax.nn.sigmoid(y_ref)
    y_ref = y_ref.reshape(B, dim_out, 2, 2, H, W)
    y_ref = jnp.transpose(y_ref, (0, 1, 4, 2, 5, 3)).reshape(B, dim_out, 2 * H, 2 * W)
    err = float(jnp.max(jnp.abs(out - y_ref)))
    assert jnp.allclose(out, y_ref, atol=1e-4, rtol=1e-4), err

    print("KERNEL_OK")
</pallas_src>

<mosaic_0001>
module attributes {stable_mosaic.version = 11 : i64} {
  func.func @_conv1x1_silu_kernel(%arg0: i32, %arg1: i32, %arg2: memref<1x4x256xbf16, #tpu.memory_space<vmem>>, %arg3: memref<16x4xbf16, #tpu.memory_space<vmem>>, %arg4: memref<16x1xf32, #tpu.memory_space<vmem>>, %arg5: memref<1x16x256xf32, #tpu.memory_space<vmem>>) attributes {dimension_semantics = [#tpu.dimension_semantics<parallel>, #tpu.dimension_semantics<parallel>], iteration_bounds = array<i64: 2, 1>, scalar_prefetch = 0 : i64, scratch_operands = 0 : i64, tpu.core_type = #tpu.core_type<tc>, window_params = [{transform_indices = @transform_0, window_bounds = array<i64: 1, 4, 256>}, {pipeline_mode = #tpu.pipeline_mode<synchronous>, transform_indices = @transform_1, window_bounds = array<i64: 16, 4>}, {pipeline_mode = #tpu.pipeline_mode<synchronous>, transform_indices = @transform_2, window_bounds = array<i64: 16, 1>}, {transform_indices = @transform_3, window_bounds = array<i64: 1, 16, 256>}]} {
    %c0 = arith.constant 0 : index
    %c0_0 = arith.constant 0 : index
    %0 = vector.load %arg3[%c0, %c0_0] : memref<16x4xbf16, #tpu.memory_space<vmem>>, vector<16x4xbf16>
    %c0_1 = arith.constant 0 : index
    %c0_2 = arith.constant 0 : index
    %c0_3 = arith.constant 0 : index
    %1 = vector.load %arg2[%c0_1, %c0_2, %c0_3] : memref<1x4x256xbf16, #tpu.memory_space<vmem>>, vector<1x4x256xbf16>
    %2 = vector.shape_cast %1 : vector<1x4x256xbf16> to vector<4x256xbf16>
    %cst = arith.constant dense<0.000000e+00> : vector<16x256xf32>
    %3 = tpu.matmul %0, %2, %cst {dimension_numbers = #tpu.dot_dimension_numbers<[1], [0], [0], [1], [0, 0, 1, 1], [], []>} : vector<16x4xbf16>, vector<4x256xbf16>, vector<16x256xf32> -> vector<16x256xf32>
    %c0_4 = arith.constant 0 : index
    %c0_5 = arith.constant 0 : index
    %4 = vector.load %arg4[%c0_4, %c0_5] : memref<16x1xf32, #tpu.memory_space<vmem>>, vector<16x1xf32>
    %5 = vector.broadcast %4 : vector<16x1xf32> to vector<16x256xf32>
    %6 = arith.addf %3, %5 : vector<16x256xf32>
    %7 = arith.negf %6 : vector<16x256xf32>
    %8 = math.exp %7 : vector<16x256xf32>
    %cst_6 = arith.constant 1.000000e+00 : f32
    %9 = vector.broadcast %cst_6 : f32 to vector<16x256xf32>
    %10 = arith.addf %9, %8 : vector<16x256xf32>
    %11 = arith.divf %9, %10 : vector<16x256xf32>
    %12 = arith.mulf %6, %11 : vector<16x256xf32>
    %c0_7 = arith.constant 0 : index
    %c0_8 = arith.constant 0 : index
    %c0_9 = arith.constant 0 : index
    %13 = vector.load %arg5[%c0_7, %c0_8, %c0_9] : memref<1x16x256xf32, #tpu.memory_space<vmem>>, vector<1x16x256xf32>
    %14 = vector.shape_cast %13 : vector<1x16x256xf32> to vector<16x256xf32>
    %15 = vector.shape_cast %12 : vector<16x256xf32> to vector<1x16x256xf32>
    tpu.vector_store %arg5[%c0_7, %c0_8, %c0_9], %15 {strides = array<i32>} : memref<1x16x256xf32, #tpu.memory_space<vmem>>, vector<1x16x256xf32>,
    return
  }
  func.func @transform_0(%arg0: i32, %arg1: i32) -> (i32, i32, i32) {
    %c0_i32 = arith.constant 0 : i32
    %c0_i32_0 = arith.constant 0 : i32
    return %arg0, %c0_i32, %arg1 : i32, i32, i32
  }
  func.func @transform_1(%arg0: i32, %arg1: i32) -> (i32, i32) {
    %c0_i32 = arith.constant 0 : i32
    %c0_i32_0 = arith.constant 0 : i32
    %c0_i32_1 = arith.constant 0 : i32
    return %c0_i32, %c0_i32_0 : i32, i32
  }
  func.func @transform_2(%arg0: i32, %arg1: i32) -> (i32, i32) {
    %c0_i32 = arith.constant 0 : i32
    %c0_i32_0 = arith.constant 0 : i32
    %c0_i32_1 = arith.constant 0 : i32
    return %c0_i32, %c0_i32_0 : i32, i32
  }
  func.func @transform_3(%arg0: i32, %arg1: i32) -> (i32, i32, i32) {
    %c0_i32 = arith.constant 0 : i32
    %c0_i32_0 = arith.constant 0 : i32
    return %arg0, %c0_i32, %arg1 : i32, i32, i32
  }
}

</mosaic_0001>

<llo_original>
// kernel: tpu_custom_call.1
$region0: #{tpu_custom_call.1}
  #allocation0 [shape = 'u32[]', space=smem, size = 0x4, offset = 0x4, fixed_abs, tag = 'smem constant byte address 0x4 - core index']
  #allocation1 [shape = 'u32[144,128]{1,0:T(1,128)}', space=vmem, size = 0x12000, scoped, tag = 'internal scratch']
  %s0 = inlined_call_operand.vmem [shape: bf16[2,4,256], index: 0, kind: input, shape index: {}]
  %s1 = inlined_call_operand.vmem [shape: bf16[16,4], index: 1, kind: input, shape index: {}]
  %s2 = inlined_call_operand.vmem [shape: f32[16,1], index: 2, kind: input, shape index: {}]
  %s3 = inlined_call_operand.hbm [shape: f32[2,16,256], index: 3, kind: output, shape index: {}]
  %s4 = sld [smem:[#allocation0]]
  $region45: #{tpu_custom_call.1} parent=0
    _
  %s6 = ssub.s32 1, %s4
  %s7 = scalar_select 0, %s6, %s4
  $region1: #{tpu_custom_call.1} parent=0
    #allocation2 [shape = 'u8[32768]{0}', space=vmem, size = 0x8000, scoped, tag = 'output window, operand 0']
    #allocation3 [shape = 's32[2]{0}', space=sflag, size = 0x8, scoped, tag = 'scoped memory for tpu_custom_call.1']
    %8 = vsyncpa [#allocation3], 0
    %s9 = scalar_lea.sflag [#allocation3], 1
    %10 = vsyncpa %s9, 0
    loop: start=0, step=1, limit=4
    $region2: #{tpu_custom_call.1} parent=1 // loop_pre_header
      _
    $region3: #{tpu_custom_call.1} parent=1 // loop_header
      %s12 = sphi 0, %s16
      %p13 = scmp.ge.s32.totalorder %s12, 4
      %s19 = sphi 0, %s31
      %s20 = sphi 0, %s27
      %s21 = sphi 0, %s19
      %s22 = sphi 0, %s20
      %s23 = sphi 0, %s21
      %s24 = sphi 0, %s22
      %s36 = sphi 0, %s38
      %s39 = sphi 0, %s36
      %s40 = sphi 0, %s39
      %s56 = sphi 0, %s40
      %s60 = sphi 0, %s60
      %s62 = sphi 0, %s60
      %s63 = sphi 0, %s62
      %s77 = sphi 0, %s63
      %s81 = sphi 0, %s81
      %s83 = sphi 0, %s81
      %s84 = sphi 0, %s83
      %s98 = sphi 0, %s84
      %s106 = sphi 0, %s108
      %s109 = sphi 0, %s106
      %s110 = sphi 0, %s109
      %s126 = sphi 0, %s110
    $region4: #{tpu_custom_call.1} parent=1 // loop_header_branch
      %15 = sbr.rel (%p13) target = $region8
    $region5: #{tpu_custom_call.1} parent=1 // loop_body
      %s17 = ssub.s32 %s12, 1
      %s18 = ssub.s32 %s12, 2
      %s25 = sadd.s32 1, %s20
      %p26 = scmp.ge.s32.totalorder %s25, 1
      %s27 = scalar_select %p26, 0, %s25
      %s28 = sadd.s32 1, %s19
      %s29 = scalar_select %p26, %s28, %s19
      %p30 = scmp.ge.s32.totalorder %s29, 2
      %s31 = scalar_select %p30, 0, %s29
      %s32 = ssub.s32 %s19, %s31
      %s33 = ssub.s32 %s20, %s27
      %s34 = sor.u32 %s32, %s33
      %p35 = scmp.eq.s32.totalorder %s34, 0
      %s37 = sadd.s32 %s36, 1
      %s38 = scalar_select %p35, %s36, %s37
      %p41 = pneg %p35
      %p42 = scmp.eq.s32.totalorder %s12, 1
      %p43 = por %p41, %p42
      %p44 = scmp.ne.s32.totalorder %s36, %s39
      %p45 = scmp.eq.s32.totalorder %s12, 0
      %p46 = por %p44, %p45
      %p47 = scmp.ne.s32.totalorder %s36, %s39
      %p48 = scmp.eq.s32.totalorder %s17, 1
      %p49 = por %p47, %p48
      %p50 = scmp.ne.s32.totalorder %s39, %s40
      %p51 = scmp.eq.s32.totalorder %s17, 0
      %p52 = por %p50, %p51
      %p53 = scmp.ne.s32.totalorder %s39, %s40
      %p54 = scmp.eq.s32.totalorder %s18, 1
      %p55 = por %p53, %p54
      %p57 = scmp.ne.s32.totalorder %s40, %s56
      %p58 = scmp.eq.s32.totalorder %s18, 0
      %p59 = por %p57, %p58
      %s61 = sadd.s32 %s60, 1
      %p64 = scmp.eq.s32.totalorder %s12, 1
      %p65 = scmp.ne.s32.totalorder %s60, %s62
      %p66 = scmp.eq.s32.totalorder %s12, 0
      %p67 = por %p65, %p66
      %p68 = scmp.ne.s32.totalorder %s60, %s62
      %p69 = scmp.eq.s32.totalorder %s17, 1
      %p70 = por %p68, %p69
      %p71 = scmp.ne.s32.totalorder %s62, %s63
      %p72 = scmp.eq.s32.totalorder %s17, 0
      %p73 = por %p71, %p72
      %p74 = scmp.ne.s32.totalorder %s62, %s63
      %p75 = scmp.eq.s32.totalorder %s18, 1
      %p76 = por %p74, %p75
      %p78 = scmp.ne.s32.totalorder %s63, %s77
      %p79 = scmp.eq.s32.totalorder %s18, 0
      %p80 = por %p78, %p79
      %s82 = sadd.s32 %s81, 1
      %p85 = scmp.eq.s32.totalorder %s12, 1
      %p86 = scmp.ne.s32.totalorder %s81, %s83
      %p87 = scmp.eq.s32.totalorder %s12, 0
      %p88 = por %p86, %p87
      %p89 = scmp.ne.s32.totalorder %s81, %s83
      %p90 = scmp.eq.s32.totalorder %s17, 1
      %p91 = por %p89, %p90
      %p92 = scmp.ne.s32.totalorder %s83, %s84
      %p93 = scmp.eq.s32.totalorder %s17, 0
      %p94 = por %p92, %p93
      %p95 = scmp.ne.s32.totalorder %s83, %s84
      %p96 = scmp.eq.s32.totalorder %s18, 1
      %p97 = por %p95, %p96
      %p99 = scmp.ne.s32.totalorder %s84, %s98
      %p100 = scmp.eq.s32.totalorder %s18, 0
      %p101 = por %p99, %p100
      %s102 = ssub.s32 %s19, %s31
      %s103 = ssub.s32 %s20, %s27
      %s104 = sor.u32 %s102, %s103
      %p105 = scmp.eq.s32.totalorder %s104, 0
      %s107 = sadd.s32 %s106, 1
      %s108 = scalar_select %p105, %s106, %s107
      %p111 = pneg %p105
      %p112 = scmp.eq.s32.totalorder %s12, 1
      %p113 = por %p111, %p112
      %p114 = scmp.ne.s32.totalorder %s106, %s109
      %p115 = scmp.eq.s32.totalorder %s12, 0
      %p116 = por %p114, %p115
      %p117 = scmp.ne.s32.totalorder %s106, %s109
      %p118 = scmp.eq.s32.totalorder %s17, 1
      %p119 = por %p117, %p118
      %p120 = scmp.ne.s32.totalorder %s109, %s110
      %p121 = scmp.eq.s32.totalorder %s17, 0
      %p122 = por %p120, %p121
      %p123 = scmp.ne.s32.totalorder %s109, %s110
      %p124 = scmp.eq.s32.totalorder %s18, 1
      %p125 = por %p123, %p124
      %p127 = scmp.ne.s32.totalorder %s110, %s126
      %p128 = scmp.eq.s32.totalorder %s18, 0
      %p129 = por %p127, %p128
      %p130 = scmp.le.s32.totalorder 1, %s12
      %p131 = scmp.lt.s32.totalorder %s12, 3
      %p132 = pnand %p130, %p131
      %p133 = pneg %p132
      // Predicated region
      $region9: #{tpu_custom_call.1} parent=5 // pred_check
        _
      $region10: #{tpu_custom_call.1} parent=5 // pred_check_branch
        %135 = sbr.rel (%p132) target = $region12
      $region11: #{tpu_custom_call.1} parent=5 // pred_region
        %s136 = ssub.s32 %s12, 1
        // Predicated region
        $region13: #{tpu_custom_call.1} parent=11 // pred_check
          %p137 = pneg %p73
        $region14: #{tpu_custom_call.1} parent=11 // pred_check_branch
          %139 = sbr.rel (%p137) target = $region16
        $region15: #{tpu_custom_call.1} parent=11 // pred_region
          _
        $region16: #{tpu_custom_call.1} parent=11 // pred_fallthru
          _
        // Predicated region
        $region17: #{tpu_custom_call.1} parent=11 // pred_check
          %p140 = pneg %p94
        $region18: #{tpu_custom_call.1} parent=11 // pred_check_branch
          %142 = sbr.rel (%p140) target = $region20
        $region19: #{tpu_custom_call.1} parent=11 // pred_region
          _
        $region20: #{tpu_custom_call.1} parent=11 // pred_fallthru
          _
      $region12: #{tpu_custom_call.1} parent=5 // pred_fallthru
        _
      %p143 = scmp.lt.s32.totalorder %s12, 2
      // Predicated region
      $region21: #{tpu_custom_call.1} parent=5 // pred_check
        %p144 = pneg %p143
      $region22: #{tpu_custom_call.1} parent=5 // pred_check_branch
        %146 = sbr.rel (%p144) target = $region24
      $region23: #{tpu_custom_call.1} parent=5 // pred_region
        // Predicated region
        $region25: #{tpu_custom_call.1} parent=23 // pred_check
          %p147 = pneg %p46
        $region26: #{tpu_custom_call.1} parent=23 // pred_check_branch
          %149 = sbr.rel (%p147) target = $region28
        $region27: #{tpu_custom_call.1} parent=23 // pred_region
          %s150 = smul.u32 2, %s20
          %p151 = scmp.lt.s32.totalorder %s19, 1
          %s152 = scalar_select %p151, %s19, 1
          %p153 = scmp.lt.s32.totalorder %s150, 1
          %s154 = scalar_select %p153, %s150, 1
          %s155 = smul.addr %s152, 2
          %s156 = sadd.s32 %s154, %s155
          %s157 = smul.addr %s156, 2
          %s158 = scalar_lea.vmem %s0, %s157
          %s159 = smul.u32 2, %s20
        $region28: #{tpu_custom_call.1} parent=23 // pred_fallthru
          _
      $region24: #{tpu_custom_call.1} parent=5 // pred_fallthru
        _
      %p160 = scmp.le.s32.totalorder 1, %s12
      %p161 = scmp.lt.s32.totalorder %s12, 3
      %p162 = pnand %p160, %p161
      %p163 = pneg %p162
      // Predicated region
      $region29: #{tpu_custom_call.1} parent=5 // pred_check
        _
      $region30: #{tpu_custom_call.1} parent=5 // pred_check_branch
        %165 = sbr.rel (%p162) target = $region32
      $region31: #{tpu_custom_call.1} parent=5 // pred_region
        %s166 = ssub.s32 %s12, 1
        %s167 = smul.u32 2, %s22
        %p168 = scmp.lt.s32.totalorder %s21, 1
        %s169 = scalar_select %p168, %s21, 1
        %p170 = scmp.lt.s32.totalorder %s167, 1
        %s171 = scalar_select %p170, %s167, 1
        %s172 = smul.addr %s169, 2
        %s173 = sadd.s32 %s171, %s172
        %s174 = smul.addr %s173, 2
        %s175 = scalar_lea.vmem %s0, %s174
        %p176 = pneg %p52
        %p177 = pneg %p49
        %p178 = pneg %p73
        %p179 = pneg %p70
        %p180 = pneg %p94
        %p181 = pneg %p91
        %p182 = pneg %p122
        %p183 = pneg %p119
        %s184 = sand.u32 %s109, 1
        %s185 = scalar_lea.sflag [#allocation3], %s184
        %s186 = sand.u32 %s109, 1
        %s187 = smul.addr %s186, 32
        %s188 = scalar_lea.vmem [#allocation2], %s187
        %s189 = smul.u32 2, %s22
        %p190 = scmp.lt.s32.totalorder %s21, 1
        %s191 = scalar_select %p190, %s21, 1
        %p192 = scmp.lt.s32.totalorder %s189, 1
        %s193 = scalar_select %p192, %s189, 1
        %s194 = smul.addr %s191, 2
        %s195 = sadd.s32 %s193, %s194
        %s196 = smul.addr %s195, 2
        %s197 = scalar_lea.vmem %s0, %s196
        %s198 = smul.u32 2, %s22
        %s199 = smul.u32 2, %s22
        %v201 = vld [vmem:[%s1] sm:$0xf]
        %v202 = vld [vmem:[%s1 + $0x4] sm:$0xf]
        %v203 = vld [vmem:[%s197] sm:$0xf]
        %v204 = vld [vmem:[%s2] sm:$0xff]
        %v205 = vld [vmem:[%s2 + $0x8] sm:$0xff]
        %207 = vset.pattern.permute.xlu0 0
        %208 = vperm.xlu0 %207, %v204
        %v209 = vpop.permute.xlu0 %208
        %212 = vset.pattern.permute.xlu0 0
        %213 = vperm.xlu0 %212, %v205
        %v214 = vpop.permute.xlu0 %213
        %v218 = vunpack.c.l.b16 %v201
        %v219 = vunpack.c.l.b16 %v202
        %v220 = vpack.c.b16 %v219, %v218
        %v223 = vunpack.c.l.s4 1983009808
        %v224 = vunpack.c.0.s8 %v223
        %v225 = vlaneseq
        %v226 = vshrl.u32 %v225, 7
        %v227 = vsub.s32 %v224, %v226
        %v228 = vrot.slane %v203, %v227
        %v229 = vcombine.high %v228, %v228
        %vm230 = vcmask 31744
        %v232 = vsel %vm230, %v220, 0
        %vm234 = vcmask 1041408
        %v236 = vsel %vm234, %v228, 0
        %v239 = vsel %vm234, %v229, 0
        %241 = vmatprep.subr.bf16.mxu0 %v239
        %242 = vmatpush1.bf16.msra.mxu0 %v236
        %243 = vmatprep.subr.bf16.mxu0 0
        %244 = vmatpush1.bf16.msra.mxu0 0
        %245 = vmatprep.subr.bf16.mxu0 0
        %246 = vmatpush1.bf16.msra.mxu0 0
        %247 = vmatprep.subr.bf16.mxu0 0
        %248 = vmatpush1.bf16.msra.mxu0 0
        %249 = vmatprep.subr.bf16.mxu0 0
        %250 = vmatpush1.bf16.msra.mxu0 0
        %251 = vmatprep.subr.bf16.mxu0 0
        %252 = vmatpush1.bf16.msra.mxu0 0
        %253 = vmatprep.subr.bf16.mxu0 0
        %254 = vmatpush1.bf16.msra.mxu0 0
        %255 = vmatprep.subr.bf16.mxu0 0
        %256 = vmatpush1.bf16.msra.mxu0 0
        %257 = vmatprep.subr.bf16.mxu0 0
        %258 = vmatpush1.bf16.msra.mxu0 0
        %259 = vmatprep.subr.bf16.mxu0 0
        %260 = vmatpush1.bf16.msra.mxu0 0
        %261 = vmatprep.subr.bf16.mxu0 0
        %262 = vmatpush1.bf16.msra.mxu0 0
        %263 = vmatprep.subr.bf16.mxu0 0
        %264 = vmatpush1.bf16.msra.mxu0 0
        %265 = vmatprep.subr.bf16.mxu0 0
        %266 = vmatpush1.bf16.msra.mxu0 0
        %267 = vmatprep.subr.bf16.mxu0 0
        %268 = vmatpush1.bf16.msra.mxu0 0
        %269 = vmatprep.subr.bf16.mxu0 0
        %270 = vmatpush1.bf16.msra.mxu0 0
        %271 = vmatprep.subr.bf16.mxu0 0
        %272 = vmatpush1.bf16.msra.mxu0 0
        %273 = vmatprep.mubr.bf16.mxu0 0
        %274 = vmatmul.mubr.bf16.gmra.mrb[0].mxu0 %v232
        %v275 = vpop.f32.mrb[0].mxu0
        %v276 = vadd.f32 %v209, %v275
        %v277 = vpop.f32.mrb[0].mxu0
        %v278 = vadd.f32 %v209, %v277
        %v279 = vpop.f32.mrb[0].mxu0
        %v280 = vadd.f32 %v214, %v279
        %v281 = vpop.f32.mrb[0].mxu0
        %v282 = vadd.f32 %v214, %v281
        %283 = vdwg.mxu0
        %v284 = vxor.u32 %v276, 2147483648
        %v285 = vxor.u32 %v278, 2147483648
        %v286 = vxor.u32 %v280, 2147483648
        %v287 = vxor.u32 %v282, 2147483648
        %v288 = vmul.f32 %v284, 1.442695
        %v289 = vpow.pop %v288
        %v290 = vmul.f32 %v285, 1.442695
        %v291 = vpow.pop %v290
        %v292 = vmul.f32 %v286, 1.442695
        %v293 = vpow.pop %v292
        %v294 = vmul.f32 %v287, 1.442695
        %v295 = vpow.pop %v294
        %v296 = vadd.f32 %v289, 1.0
        %v297 = vadd.f32 %v291, 1.0
        %v298 = vadd.f32 %v293, 1.0
        %v299 = vadd.f32 %v295, 1.0
        %v300 = vrcp.pop %v296
        %v301 = vmul.f32 1.0, %v300
        %v302 = vrcp.pop %v297
        %v303 = vmul.f32 1.0, %v302
        %v304 = vrcp.pop %v298
        %v305 = vmul.f32 1.0, %v304
        %v306 = vrcp.pop %v299
        %v307 = vmul.f32 1.0, %v306
        %v308 = vmul.f32 %v276, %v301
        %v309 = vmul.f32 %v278, %v303
        %v310 = vmul.f32 %v280, %v305
        %v311 = vmul.f32 %v282, %v307
        %312 = vst [vmem:[%s188] sm:$0xff] %v308
        %313 = vst [vmem:[%s188 + $0x8] sm:$0xff] %v309
        %314 = vst [vmem:[%s188 + $0x10] sm:$0xff] %v310
        %315 = vst [vmem:[%s188 + $0x18] sm:$0xff] %v311
        %s316 = sand.u32 %s109, 1
        %s317 = scalar_lea.sflag [#allocation3], %s316
        %s318 = sand.u32 %s109, 1
        %s319 = smul.addr %s318, 32
        %s320 = scalar_lea.vmem [#allocation2], %s319
        // Predicated region
        $region33: #{tpu_custom_call.1} parent=31 // pred_check
          %p321 = pneg %p119
        $region34: #{tpu_custom_call.1} parent=31 // pred_check_branch
          %323 = sbr.rel (%p321) target = $region36
        $region35: #{tpu_custom_call.1} parent=31 // pred_region
          %s324 = smul.u32 2, %s22
          %s326 = ssub.s32 512, 512
          %327 = vsyncadd %s317, %s326
          %s328 = smul.addr %s21, 4
          %s329 = sadd.s32 %s324, %s328
          %s330 = smul.addr %s329, 128
          %s331 = scalar_lea.hbm %s3, %s330
          %s332 = sshll.u32 %s320, 4
          %s333 = int_to_ptr.vmem [resolvable:$true] %s332
          %338 = dma.vmem_to_hbm [thread:$0]  %s333, 512, %s331, %s317, 256, 256, 16
        $region36: #{tpu_custom_call.1} parent=31 // pred_fallthru
          _
      $region32: #{tpu_custom_call.1} parent=5 // pred_fallthru
        _
      %p339 = scmp.le.s32.totalorder 2, %s12
      // Predicated region
      $region37: #{tpu_custom_call.1} parent=5 // pred_check
        %p340 = pneg %p339
      $region38: #{tpu_custom_call.1} parent=5 // pred_check_branch
        %342 = sbr.rel (%p340) target = $region40
      $region39: #{tpu_custom_call.1} parent=5 // pred_region
        %s343 = ssub.s32 %s12, 2
        // Predicated region
        $region41: #{tpu_custom_call.1} parent=39 // pred_check
          %p344 = pneg %p125
        $region42: #{tpu_custom_call.1} parent=39 // pred_check_branch
          %346 = sbr.rel (%p344) target = $region44
        $region43: #{tpu_custom_call.1} parent=39 // pred_region
          %s347 = sand.u32 %s110, 1
          %s348 = scalar_lea.sflag [#allocation3], %s347
          %s349 = sand.u32 %s110, 1
          %s350 = smul.addr %s349, 32
          %s351 = scalar_lea.vmem [#allocation2], %s350
          %352 = dma.done %s348, 512
        $region44: #{tpu_custom_call.1} parent=39 // pred_fallthru
          _
      $region40: #{tpu_custom_call.1} parent=5 // pred_fallthru
        _
    $region6: #{tpu_custom_call.1} parent=1 // loop_footer
      %s16 = sadd.s32 1, %s12
    $region7: #{tpu_custom_call.1} parent=1 // loop_footer_branch
      %11 = sbr.rel target = $region3
    $region8: #{tpu_custom_call.1} parent=1 // loop_exit
      _
    %353 = vsyncpa [#allocation3], 1
    %s354 = scalar_lea.sflag [#allocation3], 1
    %355 = vsyncpa %s354, 1

</llo_original>
